<compile_context>
chip_gen: v6e
topology: v6e:2x2x1
jax: 0.10.0
libtpu: 0.0.40
codegen_flags: <defaults>
</compile_context>

<pallas_src>
import functools

import jax
import jax.numpy as jnp
from jax.experimental import pallas as pl
from jax.experimental.pallas import tpu as pltpu

EPS = 1e-8  # torch.nn.CosineSimilarity default eps


def _cosine_sim_kernel(x_ref, yt_ref, xn_ref, yn_ref, o_ref, *, eps_t, tn):
    # x_ref:  (tm, H)      row tile of x (resident across inner j axis)
    # yt_ref: (H, tn)      column tile of y^T (streamed)  -> plain MK x KN matmul
    # xn_ref: (tm, 1)      ||x|| * temperature for this row tile (f32)
    # yn_ref: (1, M_pad)   ||y|| for ALL columns, fully VMEM resident (f32)
    # o_ref:  (tm, tn)
    dots = jnp.dot(x_ref[...], yt_ref[...], preferred_element_type=jnp.float32)

    j = pl.program_id(1)
    start = pl.multiple_of(j * tn, tn)
    yn = yn_ref[:, pl.ds(start, tn)]                       # (1, tn)
    # denom == temperature * max(||x||*||y||, eps)  (exact fold, temperature > 0)
    denom = jnp.maximum(xn_ref[...] * yn, eps_t)           # (tm, tn)
    o_ref[...] = (dots * pl.reciprocal(denom, approx=False)).astype(o_ref.dtype)


def _round_up(v, m):
    return ((v + m - 1) // m) * m


def _vmem_budget():
    # Per-generation scoped-VMEM budget with compiler headroom:
    #   v5e/v6e (128 MiB physical) -> ~100 MiB, v7x (64 MiB) -> ~50 MiB.
    try:
        info = pltpu.get_tpu_info()
        cap = int(getattr(info, "vmem_capacity_bytes", 64 << 20))
    except Exception:
        cap = 64 << 20
    return int(0.78 * cap)


def similarity(x, y, *, temperature=1.0, out_dtype=jnp.float32,
               cast_operands_to_bf16=False, tm=None, tn=None):
    """Cosine-similarity matrix divided by temperature.

    x: (N, H), y: (M, H)  ->  (N, M), matching
    Similarity()(x.unsqueeze(1), y.unsqueeze(0)) in the PyTorch module.
    """
    N, H = x.shape
    M, Hy = y.shape
    assert H == Hy, "feature dims must match"
    assert temperature > 0.0

    # Hoisted norm work: one f32 pass over x and one over y (plain XLA).
    # Temperature is folded into the x norms; eps scaled to keep exact parity:
    #   dots / max(t*|x|*|y|, t*eps) == (dots / max(|x|*|y|, eps)) / t
    x_norm = jnp.sqrt(jnp.sum(jnp.square(x.astype(jnp.float32)), -1, keepdims=True))
    y_norm = jnp.sqrt(jnp.sum(jnp.square(y.astype(jnp.float32)), -1, keepdims=True)).T
    x_norm = x_norm * jnp.float32(temperature)             # (N, 1)

    if cast_operands_to_bf16:
        # Optional: several-x MXU rate; norms above stay f32-exact.
        x = x.astype(jnp.bfloat16)
        y = y.astype(jnp.bfloat16)

    # Pre-transpose y once (amortized over all N//tm row tiles).
    yT = y.T                                               # (H, M)

    # Pad ragged N / M to multiples of 128: lane-dense output stores, no
    # full-extent-block VMEM cliff.  Padded rows/cols give 0 (denom -> eps_t).
    N_pad = _round_up(N, 128)
    M_pad = _round_up(M, 128)
    if N_pad != N:
        x = jnp.pad(x, ((0, N_pad - N), (0, 0)))
        x_norm = jnp.pad(x_norm, ((0, N_pad - N), (0, 0)))
    if M_pad != M:
        yT = jnp.pad(yT, ((0, 0), (0, M_pad - M)))
        y_norm = jnp.pad(y_norm, ((0, 0), (0, M_pad - M)))

    in_isz = x.dtype.itemsize
    y_isz = yT.dtype.itemsize
    out_isz = jnp.dtype(out_dtype).itemsize
    budget = _vmem_budget()
    resident = 4 * M_pad                                   # fully-resident y norms

    if tn is None:
        # Keep y fully resident when it uses <= ~1/3 of the budget -> every
        # input byte read from HBM exactly once.
        if 2 * M_pad * H * y_isz + resident <= budget // 3:
            tn = M_pad
        else:
            tn = 128
            for cand in (1024, 512, 256):
                if M_pad % cand == 0 and 2 * cand * H * y_isz <= budget // 3:
                    tn = cand
                    break
    if tm is None:
        # y HBM traffic scales as 1/tm -> take the biggest tm that fits.
        tm = 128
        for cand in (2048, 1024, 512, 256):
            if N_pad % cand == 0:
                fit = (2 * cand * H * in_isz          # x, double-buffered
                       + 2 * tn * H * y_isz           # y^T, double-buffered
                       + 2 * cand * tn * out_isz      # output, double-buffered
                       + 2 * cand * 4                 # x norms
                       + resident)
                if fit <= budget:
                    tm = cand
                    break
    assert N_pad % tm == 0 and M_pad % tn == 0

    kernel = functools.partial(_cosine_sim_kernel,
                               eps_t=float(EPS * temperature), tn=tn)

    cost = pl.CostEstimate(
        flops=2 * N_pad * M_pad * H,
        transcendentals=0,
        bytes_accessed=(N_pad * H * in_isz
                        + (N_pad // tm) * M_pad * H * y_isz
                        + N_pad * M_pad * out_isz),
    )

    grid = (N_pad // tm, M_pad // tn)  # i (x rows) outer -> x tile resident

    # TODO(synk): for very small H with tn < M_pad, pipeline_mode=pl.Buffered(3)
    # on the y^T BlockSpec can hide exposed DMA; left at the default depth here.
    out = pl.pallas_call(
        kernel,
        out_shape=jax.ShapeDtypeStruct((N_pad, M_pad), out_dtype),
        grid_spec=pltpu.PrefetchScalarGridSpec(
            num_scalar_prefetch=0,
            grid=grid,
            in_specs=[
                pl.BlockSpec((tm, H), lambda i, j: (i, 0)),      # x row tile
                pl.BlockSpec((H, tn), lambda i, j: (0, j)),      # y^T col tile
                pl.BlockSpec((tm, 1), lambda i, j: (i, 0)),      # x norms * temp
                pl.BlockSpec((1, M_pad), lambda i, j: (0, 0)),   # y norms, resident
            ],
            out_specs=pl.BlockSpec((tm, tn), lambda i, j: (i, j)),
        ),
        compiler_params=pltpu.CompilerParams(
            dimension_semantics=("parallel", "parallel"),
            vmem_limit_bytes=budget,
        ),
        cost_estimate=cost,
    )(x, yT, x_norm, y_norm)

    return out[:N, :M]


def similarity_ref(x, y, temperature=1.0):
    # Pure-JAX reference mirroring torch.nn.CosineSimilarity(dim=-1) / temp.
    x = x.astype(jnp.float32)
    y = y.astype(jnp.float32)
    dots = x @ y.T
    xn = jnp.linalg.norm(x, axis=-1, keepdims=True)
    yn = jnp.linalg.norm(y, axis=-1, keepdims=True)
    return dots / jnp.maximum(xn * yn.T, EPS) / temperature


if __name__ == "__main__":
    key = jax.random.PRNGKey(0)
    kx, ky = jax.random.split(key)

    N, M, H = 16, 8, 32          # small: 16 "query" rows vs 8 "key" rows, hidden 32
    temperature = 0.05           # typical SimCSE-style temperature

    x = jax.random.normal(kx, (N, H), dtype=jnp.float32)
    y = jax.random.normal(ky, (M, H), dtype=jnp.float32)

    out = similarity(x, y, temperature=temperature)
    out = jax.block_until_ready(out)

    ref = similarity_ref(x, y, temperature=temperature)
    assert out.shape == (N, M)
    assert jnp.allclose(out, ref, atol=1e-4, rtol=1e-4), "mismatch vs reference"

    print("KERNEL_OK")
</pallas_src>

<mosaic_0001>
module attributes {stable_mosaic.version = 11 : i64} {
  func.func @_cosine_sim_kernel(%arg0: i32, %arg1: i32, %arg2: memref<128x32xf32, #tpu.memory_space<vmem>>, %arg3: memref<32x128xf32, #tpu.memory_space<vmem>>, %arg4: memref<128x1xf32, #tpu.memory_space<vmem>>, %arg5: memref<1x128xf32, #tpu.memory_space<vmem>>, %arg6: memref<128x128xf32, #tpu.memory_space<vmem>>) attributes {dimension_semantics = [#tpu.dimension_semantics<parallel>, #tpu.dimension_semantics<parallel>], iteration_bounds = array<i64: 1, 1>, scalar_prefetch = 0 : i64, scratch_operands = 0 : i64, tpu.core_type = #tpu.core_type<tc>, window_params = [{transform_indices = @transform_0, window_bounds = array<i64: 128, 32>}, {transform_indices = @transform_1, window_bounds = array<i64: 32, 128>}, {transform_indices = @transform_2, window_bounds = array<i64: 128, 1>}, {pipeline_mode = #tpu.pipeline_mode<synchronous>, transform_indices = @transform_3, window_bounds = array<i64: 1, 128>}, {transform_indices = @transform_4, window_bounds = array<i64: 128, 128>}]} {
    %c0 = arith.constant 0 : index
    %c0_0 = arith.constant 0 : index
    %0 = vector.load %arg2[%c0, %c0_0] : memref<128x32xf32, #tpu.memory_space<vmem>>, vector<128x32xf32>
    %c0_1 = arith.constant 0 : index
    %c0_2 = arith.constant 0 : index
    %1 = vector.load %arg3[%c0_1, %c0_2] : memref<32x128xf32, #tpu.memory_space<vmem>>, vector<32x128xf32>
    %cst = arith.constant dense<0.000000e+00> : vector<128x128xf32>
    %2 = tpu.matmul %0, %1, %cst {dimension_numbers = #tpu.dot_dimension_numbers<[1], [0], [0], [1], [0, 0, 1, 1], [], []>} : vector<128x32xf32>, vector<32x128xf32>, vector<128x128xf32> -> vector<128x128xf32>
    %c128_i32 = arith.constant 128 : i32
    %3 = arith.muli %arg1, %c128_i32 : i32
    %4 = tpu.assume_multiple %3, 128 : i32
    %c0_3 = arith.constant 0 : index
    %5 = arith.index_cast %4 : i32 to index
    %6 = vector.load %arg5[%c0_3, %5] : memref<1x128xf32, #tpu.memory_space<vmem>>, vector<1x128xf32>
    %c0_4 = arith.constant 0 : index
    %c0_5 = arith.constant 0 : index
    %7 = vector.load %arg4[%c0_4, %c0_5] : memref<128x1xf32, #tpu.memory_space<vmem>>, vector<128x1xf32>
    %8 = vector.broadcast %7 : vector<128x1xf32> to vector<128x128xf32>
    %9 = vector.broadcast %6 : vector<1x128xf32> to vector<128x128xf32>
    %10 = arith.mulf %8, %9 : vector<128x128xf32>
    %cst_6 = arith.constant 5.000000e-10 : f32
    %11 = vector.broadcast %cst_6 : f32 to vector<128x128xf32>
    %12 = arith.maximumf %10, %11 : vector<128x128xf32>
    %13 = tpu.reciprocal %12 : vector<128x128xf32> -> vector<128x128xf32>
    %14 = arith.mulf %2, %13 : vector<128x128xf32>
    %c0_7 = arith.constant 0 : index
    %c0_8 = arith.constant 0 : index
    %15 = vector.load %arg6[%c0_7, %c0_8] : memref<128x128xf32, #tpu.memory_space<vmem>>, vector<128x128xf32>
    tpu.vector_store %arg6[%c0_7, %c0_8], %14 {strides = array<i32>} : memref<128x128xf32, #tpu.memory_space<vmem>>, vector<128x128xf32>,
    return
  }
  func.func @transform_0(%arg0: i32, %arg1: i32) -> (i32, i32) {
    %c0_i32 = arith.constant 0 : i32
    %c0_i32_0 = arith.constant 0 : i32
    return %arg0, %c0_i32 : i32, i32
  }
  func.func @transform_1(%arg0: i32, %arg1: i32) -> (i32, i32) {
    %c0_i32 = arith.constant 0 : i32
    %c0_i32_0 = arith.constant 0 : i32
    return %c0_i32, %arg1 : i32, i32
  }
  func.func @transform_2(%arg0: i32, %arg1: i32) -> (i32, i32) {
    %c0_i32 = arith.constant 0 : i32
    %c0_i32_0 = arith.constant 0 : i32
    return %arg0, %c0_i32 : i32, i32
  }
  func.func @transform_3(%arg0: i32, %arg1: i32) -> (i32, i32) {
    %c0_i32 = arith.constant 0 : i32
    %c0_i32_0 = arith.constant 0 : i32
    %c0_i32_1 = arith.constant 0 : i32
    return %c0_i32, %c0_i32_0 : i32, i32
  }
  func.func @transform_4(%arg0: i32, %arg1: i32) -> (i32, i32) {
    %c0_i32 = arith.constant 0 : i32
    return %arg0, %arg1 : i32, i32
  }
}

</mosaic_0001>

<llo_original>
// kernel: tpu_custom_call.1
$region0: #{tpu_custom_call.1}
  #allocation0 [shape = 'u32[]', space=smem, size = 0x4, offset = 0x4, fixed_abs, tag = 'smem constant byte address 0x4 - core index']
  #allocation1 [shape = 'u32[144,128]{1,0:T(1,128)}', space=vmem, size = 0x12000, scoped, tag = 'internal scratch']
  %s0 = inlined_call_operand.vmem [shape: f32[128,32], index: 0, kind: input, shape index: {}]
  %s1 = inlined_call_operand.vmem [shape: f32[32,128], index: 1, kind: input, shape index: {}]
  %s2 = inlined_call_operand.vmem [shape: f32[128,1], index: 2, kind: input, shape index: {}]
  %s3 = inlined_call_operand.vmem [shape: f32[1,128], index: 3, kind: input, shape index: {}]
  %s4 = inlined_call_operand.hbm [shape: f32[128,128], index: 4, kind: output, shape index: {}]
  %s5 = sld [smem:[#allocation0]]
  $region26: #{tpu_custom_call.1} parent=0
    _
  %s7 = ssub.s32 1, %s5
  %s8 = scalar_select 0, %s7, %s5
  $region1: #{tpu_custom_call.1} parent=0
    #allocation2 [shape = 'u8[65536]{0}', space=vmem, size = 0x10000, scoped, tag = 'output window, operand 0, single buffered']
    #allocation3 [shape = 's32[1]{0}', space=sflag, size = 0x4, scoped, tag = 'scoped memory for tpu_custom_call.1']
    %9 = vsyncpa [#allocation3], 0
    // Predicated region
    $region2: #{tpu_custom_call.1} parent=1 // pred_check
      _
    $region3: #{tpu_custom_call.1} parent=1 // pred_check_branch
      %11 = sbr.rel (0) target = $region5
    $region4: #{tpu_custom_call.1} parent=1 // pred_region
      _
    $region5: #{tpu_custom_call.1} parent=1 // pred_fallthru
      _
    // Predicated region
    $region6: #{tpu_custom_call.1} parent=1 // pred_check
      _
    $region7: #{tpu_custom_call.1} parent=1 // pred_check_branch
      %13 = sbr.rel (0) target = $region9
    $region8: #{tpu_custom_call.1} parent=1 // pred_region
      _
    $region9: #{tpu_custom_call.1} parent=1 // pred_fallthru
      _
    // Predicated region
    $region10: #{tpu_custom_call.1} parent=1 // pred_check
      _
    $region11: #{tpu_custom_call.1} parent=1 // pred_check_branch
      %15 = sbr.rel (0) target = $region13
    $region12: #{tpu_custom_call.1} parent=1 // pred_region
      _
    $region13: #{tpu_custom_call.1} parent=1 // pred_fallthru
      _
    // Predicated region
    $region14: #{tpu_custom_call.1} parent=1 // pred_check
      _
    $region15: #{tpu_custom_call.1} parent=1 // pred_check_branch
      %17 = sbr.rel (0) target = $region17
    $region16: #{tpu_custom_call.1} parent=1 // pred_region
      _
    $region17: #{tpu_custom_call.1} parent=1 // pred_fallthru
      _
    %v18 = vld [vmem:[%s0] sm:$0xff]
    %v19 = vld [vmem:[%s0 + $0x8] sm:$0xff]
    %v20 = vld [vmem:[%s0 + $0x10] sm:$0xff]
    %v21 = vld [vmem:[%s0 + $0x18] sm:$0xff]
    %v22 = vld [vmem:[%s0 + $0x20] sm:$0xff]
    %v23 = vld [vmem:[%s0 + $0x28] sm:$0xff]
    %v24 = vld [vmem:[%s0 + $0x30] sm:$0xff]
    %v25 = vld [vmem:[%s0 + $0x38] sm:$0xff]
    %v26 = vld [vmem:[%s0 + $0x40] sm:$0xff]
    %v27 = vld [vmem:[%s0 + $0x48] sm:$0xff]
    %v28 = vld [vmem:[%s0 + $0x50] sm:$0xff]
    %v29 = vld [vmem:[%s0 + $0x58] sm:$0xff]
    %v30 = vld [vmem:[%s0 + $0x60] sm:$0xff]
    %v31 = vld [vmem:[%s0 + $0x68] sm:$0xff]
    %v32 = vld [vmem:[%s0 + $0x70] sm:$0xff]
    %v33 = vld [vmem:[%s0 + $0x78] sm:$0xff]
    %v34 = vld [vmem:[%s1] sm:$0xff]
    %v35 = vld [vmem:[%s1 + $0x8] sm:$0xff]
    %v36 = vld [vmem:[%s1 + $0x10] sm:$0xff]
    %v37 = vld [vmem:[%s1 + $0x18] sm:$0xff]
    %vm38 = vcmask 261120
    %v40 = vsel %vm38, %v18, 0
    %v43 = vsel %vm38, %v19, 0
    %v46 = vsel %vm38, %v20, 0
    %v49 = vsel %vm38, %v21, 0
    %v52 = vsel %vm38, %v22, 0
    %v55 = vsel %vm38, %v23, 0
    %v58 = vsel %vm38, %v24, 0
    %v61 = vsel %vm38, %v25, 0
    %v64 = vsel %vm38, %v26, 0
    %v67 = vsel %vm38, %v27, 0
    %v70 = vsel %vm38, %v28, 0
    %v73 = vsel %vm38, %v29, 0
    %v76 = vsel %vm38, %v30, 0
    %v79 = vsel %vm38, %v31, 0
    %v82 = vsel %vm38, %v32, 0
    %v85 = vsel %vm38, %v33, 0
    %87 = vmatprep.subr.mxu0 0.0
    %88 = vmatpush1.msra.mxu0 0.0
    %89 = vmatprep.subr.mxu0 0.0
    %90 = vmatpush1.msra.mxu0 0.0
    %91 = vmatprep.subr.mxu0 0.0
    %92 = vmatpush1.msra.mxu0 0.0
    %93 = vmatprep.subr.mxu0 0.0
    %94 = vmatpush1.msra.mxu0 0.0
    %95 = vmatprep.subr.mxu0 0.0
    %96 = vmatpush1.msra.mxu0 0.0
    %97 = vmatprep.subr.mxu0 0.0
    %98 = vmatpush1.msra.mxu0 0.0
    %99 = vmatprep.subr.mxu0 0.0
    %100 = vmatpush1.msra.mxu0 0.0
    %101 = vmatprep.subr.mxu0 0.0
    %102 = vmatpush1.msra.mxu0 0.0
    %103 = vmatprep.subr.mxu0 0.0
    %104 = vmatpush1.msra.mxu0 0.0
    %105 = vmatprep.subr.mxu0 0.0
    %106 = vmatpush1.msra.mxu0 0.0
    %107 = vmatprep.subr.mxu0 0.0
    %108 = vmatpush1.msra.mxu0 0.0
    %109 = vmatprep.subr.mxu0 0.0
    %110 = vmatpush1.msra.mxu0 0.0
    %111 = vmatprep.subr.mxu0 0.0
    %112 = vmatpush1.msra.mxu0 %v37
    %113 = vmatprep.subr.mxu0 0.0
    %114 = vmatpush1.msra.mxu0 %v36
    %115 = vmatprep.subr.mxu0 0.0
    %116 = vmatpush1.msra.mxu0 %v35
    %117 = vmatprep.subr.mxu0 0.0
    %118 = vmatpush1.msra.mxu0 %v34
    %119 = vmatprep.subr.mxu0 0.0
    %120 = vmatpush2.msra.mxu0 0.0
    %121 = vmatprep.subr.mxu0 0.0
    %122 = vmatpush2.msra.mxu0 0.0
    %123 = vmatprep.subr.mxu0 0.0
    %124 = vmatpush2.msra.mxu0 0.0
    %125 = vmatprep.subr.mxu0 0.0
    %126 = vmatpush2.msra.mxu0 0.0
    %127 = vmatprep.subr.mxu0 0.0
    %128 = vmatpush2.msra.mxu0 0.0
    %129 = vmatprep.subr.mxu0 0.0
    %130 = vmatpush2.msra.mxu0 0.0
    %131 = vmatprep.subr.mxu0 0.0
    %132 = vmatpush2.msra.mxu0 0.0
    %133 = vmatprep.subr.mxu0 0.0
    %134 = vmatpush2.msra.mxu0 0.0
    %135 = vmatprep.subr.mxu0 0.0
    %136 = vmatpush2.msra.mxu0 0.0
    %137 = vmatprep.subr.mxu0 0.0
    %138 = vmatpush2.msra.mxu0 0.0
    %139 = vmatprep.subr.mxu0 0.0
    %140 = vmatpush2.msra.mxu0 0.0
    %141 = vmatprep.subr.mxu0 0.0
    %142 = vmatpush2.msra.mxu0 0.0
    %143 = vmatprep.subr.mxu0 0.0
    %144 = vmatpush2.msra.mxu0 0.0
    %145 = vmatprep.subr.mxu0 0.0
    %146 = vmatpush2.msra.mxu0 0.0
    %147 = vmatprep.subr.mxu0 0.0
    %148 = vmatpush2.msra.mxu0 0.0
    %149 = vmatprep.subr.mxu0 0.0
    %150 = vmatpush2.msra.mxu0 0.0
    %151 = vmatprep.mubr.f32.mxu0 0.0
    %152 = vmatmul.mubr.f32.gmra.mxu0 %v40
    %v153 = vpop.f32.mrf.mxu0
    %v154 = vadd.f32 0.0, %v153
    %v155 = vpop.f32.mrf.mxu0
    %156 = vmatprep.mubr.f32.mxu0 0.0
    %157 = vmatmul.mubr.f32.gmra.mxu0 %v43
    %v158 = vpop.f32.mrf.mxu0
    %v159 = vadd.f32 0.0, %v158
    %v160 = vpop.f32.mrf.mxu0
    %161 = vmatprep.mubr.f32.mxu0 0.0
    %162 = vmatmul.mubr.f32.gmra.mxu0 %v46
    %v163 = vpop.f32.mrf.mxu0
    %v164 = vadd.f32 0.0, %v163
    %v165 = vpop.f32.mrf.mxu0
    %166 = vmatprep.mubr.f32.mxu0 0.0
    %167 = vmatmul.mubr.f32.gmra.mxu0 %v49
    %v168 = vpop.f32.mrf.mxu0
    %v169 = vadd.f32 0.0, %v168
    %v170 = vpop.f32.mrf.mxu0
    %171 = vmatprep.mubr.f32.mxu0 0.0
    %172 = vmatmul.mubr.f32.gmra.mxu0 %v52
    %v173 = vpop.f32.mrf.mxu0
    %v174 = vadd.f32 0.0, %v173
    %v175 = vpop.f32.mrf.mxu0
    %176 = vmatprep.mubr.f32.mxu0 0.0
    %177 = vmatmul.mubr.f32.gmra.mxu0 %v55
    %v178 = vpop.f32.mrf.mxu0
    %v179 = vadd.f32 0.0, %v178
    %v180 = vpop.f32.mrf.mxu0
    %181 = vmatprep.mubr.f32.mxu0 0.0
    %182 = vmatmul.mubr.f32.gmra.mxu0 %v58
    %v183 = vpop.f32.mrf.mxu0
    %v184 = vadd.f32 0.0, %v183
    %v185 = vpop.f32.mrf.mxu0
    %186 = vmatprep.mubr.f32.mxu0 0.0
    %187 = vmatmul.mubr.f32.gmra.mxu0 %v61
    %v188 = vpop.f32.mrf.mxu0
    %v189 = vadd.f32 0.0, %v188
    %v190 = vpop.f32.mrf.mxu0
    %191 = vmatprep.mubr.f32.mxu0 0.0
    %192 = vmatmul.mubr.f32.gmra.mxu0 %v64
    %v193 = vpop.f32.mrf.mxu0
    %v194 = vadd.f32 0.0, %v193
    %v195 = vpop.f32.mrf.mxu0
    %196 = vmatprep.mubr.f32.mxu0 0.0
    %197 = vmatmul.mubr.f32.gmra.mxu0 %v67
    %v198 = vpop.f32.mrf.mxu0
    %v199 = vadd.f32 0.0, %v198
    %v200 = vpop.f32.mrf.mxu0
    %201 = vmatprep.mubr.f32.mxu0 0.0
    %202 = vmatmul.mubr.f32.gmra.mxu0 %v70
    %v203 = vpop.f32.mrf.mxu0
    %v204 = vadd.f32 0.0, %v203
    %v205 = vpop.f32.mrf.mxu0
    %206 = vmatprep.mubr.f32.mxu0 0.0
    %207 = vmatmul.mubr.f32.gmra.mxu0 %v73
    %v208 = vpop.f32.mrf.mxu0
    %v209 = vadd.f32 0.0, %v208
    %v210 = vpop.f32.mrf.mxu0
    %211 = vmatprep.mubr.f32.mxu0 0.0
    %212 = vmatmul.mubr.f32.gmra.mxu0 %v76
    %v213 = vpop.f32.mrf.mxu0
    %v214 = vadd.f32 0.0, %v213
    %v215 = vpop.f32.mrf.mxu0
    %216 = vmatprep.mubr.f32.mxu0 0.0
    %217 = vmatmul.mubr.f32.gmra.mxu0 %v79
    %v218 = vpop.f32.mrf.mxu0
    %v219 = vadd.f32 0.0, %v218
    %v220 = vpop.f32.mrf.mxu0
    %221 = vmatprep.mubr.f32.mxu0 0.0
    %222 = vmatmul.mubr.f32.gmra.mxu0 %v82
    %v223 = vpop.f32.mrf.mxu0
    %v224 = vadd.f32 0.0, %v223
    %v225 = vpop.f32.mrf.mxu0
    %226 = vmatprep.mubr.f32.mxu0 0.0
    %227 = vmatmul.mubr.f32.gmra.mxu0 %v85
    %v228 = vpop.f32.mrf.mxu0
    %v229 = vadd.f32 0.0, %v228
    %v230 = vpop.f32.mrf.mxu0
    %231 = vdwg.mxu0
    %s232 = smul.u32 0, 128
    %s233 = sshra.s32 %s232, 7
    %s234 = sand.u32 %s232, 127
    %s235 = scalar_lea.vmem %s3, %s233
    %v236 = vld [vmem:[%s235] sm:$0x1]
    %v237 = vld [vmem:[%s2] sm:$0xff]
    %v238 = vld [vmem:[%s2 + $0x8] sm:$0xff]
    %v239 = vld [vmem:[%s2 + $0x10] sm:$0xff]
    %v240 = vld [vmem:[%s2 + $0x18] sm:$0xff]
    %v241 = vld [vmem:[%s2 + $0x20] sm:$0xff]
    %v242 = vld [vmem:[%s2 + $0x28] sm:$0xff]
    %v243 = vld [vmem:[%s2 + $0x30] sm:$0xff]
    %v244 = vld [vmem:[%s2 + $0x38] sm:$0xff]
    %v245 = vld [vmem:[%s2 + $0x40] sm:$0xff]
    %v246 = vld [vmem:[%s2 + $0x48] sm:$0xff]
    %v247 = vld [vmem:[%s2 + $0x50] sm:$0xff]
    %v248 = vld [vmem:[%s2 + $0x58] sm:$0xff]
    %v249 = vld [vmem:[%s2 + $0x60] sm:$0xff]
    %v250 = vld [vmem:[%s2 + $0x68] sm:$0xff]
    %v251 = vld [vmem:[%s2 + $0x70] sm:$0xff]
    %v252 = vld [vmem:[%s2 + $0x78] sm:$0xff]
    %254 = vset.pattern.permute.xlu0 0
    %255 = vperm.xlu0 %254, %v237
    %v256 = vpop.permute.xlu0 %255
    %259 = vset.pattern.permute.xlu0 0
    %260 = vperm.xlu0 %259, %v238
    %v261 = vpop.permute.xlu0 %260
    %264 = vset.pattern.permute.xlu0 0
    %265 = vperm.xlu0 %264, %v239
    %v266 = vpop.permute.xlu0 %265
    %269 = vset.pattern.permute.xlu0 0
    %270 = vperm.xlu0 %269, %v240
    %v271 = vpop.permute.xlu0 %270
    %274 = vset.pattern.permute.xlu0 0
    %275 = vperm.xlu0 %274, %v241
    %v276 = vpop.permute.xlu0 %275
    %279 = vset.pattern.permute.xlu0 0
    %280 = vperm.xlu0 %279, %v242
    %v281 = vpop.permute.xlu0 %280
    %284 = vset.pattern.permute.xlu0 0
    %285 = vperm.xlu0 %284, %v243
    %v286 = vpop.permute.xlu0 %285
    %289 = vset.pattern.permute.xlu0 0
    %290 = vperm.xlu0 %289, %v244
    %v291 = vpop.permute.xlu0 %290
    %294 = vset.pattern.permute.xlu0 0
    %295 = vperm.xlu0 %294, %v245
    %v296 = vpop.permute.xlu0 %295
    %299 = vset.pattern.permute.xlu0 0
    %300 = vperm.xlu0 %299, %v246
    %v301 = vpop.permute.xlu0 %300
    %304 = vset.pattern.permute.xlu0 0
    %305 = vperm.xlu0 %304, %v247
    %v306 = vpop.permute.xlu0 %305
    %309 = vset.pattern.permute.xlu0 0
    %310 = vperm.xlu0 %309, %v248
    %v311 = vpop.permute.xlu0 %310
    %314 = vset.pattern.permute.xlu0 0
    %315 = vperm.xlu0 %314, %v249
    %v316 = vpop.permute.xlu0 %315
    %319 = vset.pattern.permute.xlu0 0
    %320 = vperm.xlu0 %319, %v250
    %v321 = vpop.permute.xlu0 %320
    %324 = vset.pattern.permute.xlu0 0
    %325 = vperm.xlu0 %324, %v251
    %v326 = vpop.permute.xlu0 %325
    %329 = vset.pattern.permute.xlu0 0
    %330 = vperm.xlu0 %329, %v252
    %v331 = vpop.permute.xlu0 %330
    %v334 = vlaneseq
    %v335 = vshrl.u32 %v334, 7
    %v336 = vsub.s32 0, %v335
    %v337 = vrot.slane %v236, %v336
    %v339 = vmul.f32 %v256, %v337
    %v340 = vmul.f32 %v261, %v337
    %v341 = vmul.f32 %v266, %v337
    %v342 = vmul.f32 %v271, %v337
    %v343 = vmul.f32 %v276, %v337
    %v344 = vmul.f32 %v281, %v337
    %v345 = vmul.f32 %v286, %v337
    %v346 = vmul.f32 %v291, %v337
    %v347 = vmul.f32 %v296, %v337
    %v348 = vmul.f32 %v301, %v337
    %v349 = vmul.f32 %v306, %v337
    %v350 = vmul.f32 %v311, %v337
    %v351 = vmul.f32 %v316, %v337
    %v352 = vmul.f32 %v321, %v337
    %v353 = vmul.f32 %v326, %v337
    %v354 = vmul.f32 %v331, %v337
    %v355 = vmax.f32 %v339, 5e-10
    %v356 = vmax.f32 %v340, 5e-10
    %v357 = vmax.f32 %v341, 5e-10
    %v358 = vmax.f32 %v342, 5e-10
    %v359 = vmax.f32 %v343, 5e-10
    %v360 = vmax.f32 %v344, 5e-10
    %v361 = vmax.f32 %v345, 5e-10
    %v362 = vmax.f32 %v346, 5e-10
    %v363 = vmax.f32 %v347, 5e-10
    %v364 = vmax.f32 %v348, 5e-10
    %v365 = vmax.f32 %v349, 5e-10
    %v366 = vmax.f32 %v350, 5e-10
    %v367 = vmax.f32 %v351, 5e-10
    %v368 = vmax.f32 %v352, 5e-10
    %v369 = vmax.f32 %v353, 5e-10
    %v370 = vmax.f32 %v354, 5e-10
    %v371 = vrcp.pop %v355
    %v372 = vrcp.pop %v356
    %v373 = vrcp.pop %v357
    %v374 = vrcp.pop %v358
    %v375 = vrcp.pop %v359
    %v376 = vrcp.pop %v360
    %v377 = vrcp.pop %v361
    %v378 = vrcp.pop %v362
    %v379 = vrcp.pop %v363
    %v380 = vrcp.pop %v364
    %v381 = vrcp.pop %v365
    %v382 = vrcp.pop %v366
    %v383 = vrcp.pop %v367
    %v384 = vrcp.pop %v368
    %v385 = vrcp.pop %v369
    %v386 = vrcp.pop %v370
    %v387 = vmul.f32 %v154, %v371
    %v388 = vmul.f32 %v159, %v372
    %v389 = vmul.f32 %v164, %v373
    %v390 = vmul.f32 %v169, %v374
    %v391 = vmul.f32 %v174, %v375
    %v392 = vmul.f32 %v179, %v376
    %v393 = vmul.f32 %v184, %v377
    %v394 = vmul.f32 %v189, %v378
    %v395 = vmul.f32 %v194, %v379
    %v396 = vmul.f32 %v199, %v380
    %v397 = vmul.f32 %v204, %v381
    %v398 = vmul.f32 %v209, %v382
    %v399 = vmul.f32 %v214, %v383
    %v400 = vmul.f32 %v219, %v384
    %v401 = vmul.f32 %v224, %v385
    %v402 = vmul.f32 %v229, %v386
    %403 = vst [vmem:[#allocation2] sm:$0xff] %v387
    %404 = vst [vmem:[#allocation2 + $0x8] sm:$0xff] %v388
    %405 = vst [vmem:[#allocation2 + $0x10] sm:$0xff] %v389
    %406 = vst [vmem:[#allocation2 + $0x18] sm:$0xff] %v390
    %407 = vst [vmem:[#allocation2 + $0x20] sm:$0xff] %v391
    %408 = vst [vmem:[#allocation2 + $0x28] sm:$0xff] %v392
    %409 = vst [vmem:[#allocation2 + $0x30] sm:$0xff] %v393
    %410 = vst [vmem:[#allocation2 + $0x38] sm:$0xff] %v394
    %411 = vst [vmem:[#allocation2 + $0x40] sm:$0xff] %v395
    %412 = vst [vmem:[#allocation2 + $0x48] sm:$0xff] %v396
    %413 = vst [vmem:[#allocation2 + $0x50] sm:$0xff] %v397
    %414 = vst [vmem:[#allocation2 + $0x58] sm:$0xff] %v398
    %415 = vst [vmem:[#allocation2 + $0x60] sm:$0xff] %v399
    %416 = vst [vmem:[#allocation2 + $0x68] sm:$0xff] %v400
    %417 = vst [vmem:[#allocation2 + $0x70] sm:$0xff] %v401
    %418 = vst [vmem:[#allocation2 + $0x78] sm:$0xff] %v402
    // Predicated region
    $region18: #{tpu_custom_call.1} parent=1 // pred_check
      _
    $region19: #{tpu_custom_call.1} parent=1 // pred_check_branch
      %420 = sbr.rel (0) target = $region21
    $region20: #{tpu_custom_call.1} parent=1 // pred_region
      %s422 = ssub.s32 2048, 2048
      %423 = vsyncadd [#allocation3], %s422
      %s424 = sshll.u32 [#allocation2], 4
      %s425 = int_to_ptr.vmem [resolvable:$true] %s424
      %430 = dma.vmem_to_hbm [thread:$0]  %s425, 2048, %s4, [#allocation3], 128, 128, 8
    $region21: #{tpu_custom_call.1} parent=1 // pred_fallthru
      _
    // Predicated region
    $region22: #{tpu_custom_call.1} parent=1 // pred_check
      _
    $region23: #{tpu_custom_call.1} parent=1 // pred_check_branch
      %432 = sbr.rel (0) target = $region25
    $region24: #{tpu_custom_call.1} parent=1 // pred_region
      %433 = dma.done [#allocation3], 2048
    $region25: #{tpu_custom_call.1} parent=1 // pred_fallthru
      _
    %434 = vsyncpa [#allocation3], 1

</llo_original>
